<compile_context>
chip_gen: v7x
topology: tpu7x:2x2x1
jax: 0.10.0
libtpu: 0.0.40
codegen_flags: <defaults>
</compile_context>

<pallas_src>
import jax
import jax.numpy as jnp
from jax.experimental import pallas as pl
from jax.experimental.pallas import tpu as pltpu

# ------------------------------------------------------------------------
# Synthetic (small) configuration consistent with the module's structure.
# Real ENC_FEAT['resnet'] ends at 2048 channels; we use a small synthetic
# channel table so the demo runs at toy sizes.
# ------------------------------------------------------------------------
ENC_FEAT_SMALL = [[8, 2], [16, 4], [32, 8], [64, 16], [64, 32]]  # [channels, stride]
LATENT_DIM = 24          # default latent_dim of NoiseInjectedDepthEstimationModule
DEC_FEAT = 32            # decoder_feat
FW_PASS = 2              # number of noisy forward passes (stacked by dict_stack)
MAX_DEPTH = 10.0         # stand-in depth range upper bound
LANE = 128               # TPU lane width
SUBLANE = 8              # TPU sublane width


def _round_up(x, m):
    return ((x + m - 1) // m) * m


# ------------------------------------------------------------------------
# Pallas kernel + wrapper: 3x3 conv (padding=1, stride 1) + bias over the
# x-only part of the noise_conv weights.
# ------------------------------------------------------------------------
def conv3x3_bias_pallas(x_nchw, w_oihw, b, *, cout_tile=LANE):
    """3x3 conv, padding=1, stride 1, plus bias (x-only weights, Cin == C)."""
    N, C, H, W = x_nchw.shape
    Cout, Cin, KH, KW = w_oihw.shape
    assert (KH, KW) == (3, 3) and Cin == C

    Cin_p = _round_up(Cin, LANE)
    Cout_p = _round_up(Cout, cout_tile)
    n_t = Cout_p // cout_tile
    Ct = cout_tile
    Wp_a = _round_up(W + 2, SUBLANE)   # conv padding (1,1) + sublane alignment
    R = H * Wp_a                       # flat (width-padded) output rows

    # --- operand prep: one fused XLA copy per forward, bf16 MXU operands ---
    # NCHW -> NHWC, spatial zero-pad, width-align to 8, channel-pad to lanes,
    # flatten rows.  All pad values are exact zeros (roll invariant relies on it).
    x_nhwc = jnp.transpose(x_nchw, (0, 2, 3, 1))
    xpad = jnp.pad(x_nhwc, ((0, 0), (1, 1), (1, Wp_a - W - 1), (0, Cin_p - Cin)))
    xflat = xpad.reshape(N, (H + 2) * Wp_a, Cin_p).astype(jnp.bfloat16)

    # OIHW -> HWIO, lane-padded; pack the 3 kw taps along the lane axis per
    # Cout tile: column (kw*Ct + c) of block j == tap kw, output channel j*Ct+c.
    w_hwio = jnp.transpose(w_oihw, (2, 3, 1, 0))
    w_pad = jnp.pad(w_hwio, ((0, 0), (0, 0), (0, Cin_p - Cin), (0, Cout_p - Cout)))
    w_packed = (w_pad.reshape(3, 3, Cin_p, n_t, Ct)
                .transpose(0, 2, 3, 1, 4)
                .reshape(3, Cin_p, n_t * 3 * Ct)
                .astype(jnp.bfloat16))
    b_p = jnp.pad(b, (0, Cout_p - Cout)).reshape(1, Cout_p).astype(jnp.float32)

    def kernel(xflat_ref, w_ref, b_ref, o_ref, acc_ref):
        # xflat_ref: (1, (H+2)*Wp_a, Cin_p) bf16 — flat, 8-aligned padded rows
        # w_ref    : (3, Cin_p, 3*Ct)       bf16 — kw packed along the lane axis
        # b_ref    : (1, Ct)                f32
        # o_ref    : (1, R, Ct)             f32  — width-padded flat output
        # acc_ref  : (R, Ct)                f32 VMEM scratch accumulator
        acc_ref[...] = jnp.broadcast_to(b_ref[...], (R, Ct))
        for kh in range(3):
            # Aligned slab view: flat rows kh*Wp_a .. kh*Wp_a+R-1 (Wp_a % 8 == 0).
            slab = xflat_ref[0, kh * Wp_a:kh * Wp_a + R, :]
            # One wide MXU matmul covering all three kw taps of this kh.
            p = jnp.dot(slab, w_ref[kh], preferred_element_type=jnp.float32)
            # Lane-aligned split into kw groups; the (kw-1) column shift is a
            # sublane roll of the MXU result (XLU slot, nearly free).  Wrapped
            # rows land only in discarded padding columns, and the padded
            # columns of xflat are zero, so the roll is exact.
            acc_ref[...] += (pltpu.roll(p[:, :Ct], shift=1, axis=0)
                             + p[:, Ct:2 * Ct]
                             + pltpu.roll(p[:, 2 * Ct:], shift=R - 1, axis=0))
        # Single aligned, unmasked store of the whole accumulator.
        o_ref[0, :, :] = acc_ref[...].astype(o_ref.dtype)

    cost = pl.CostEstimate(
        flops=2 * N * H * W * Cin * Cout * 9,
        transcendentals=0,
        bytes_accessed=(xflat.size * 2 * n_t + w_packed.size * 2
                        + b_p.size * 4 + N * R * Cout_p * 4))

    # Grid (Cout tiles, N): the weight tile block index is constant across the
    # inner batch axis, so each weight tile is DMA'd once and reused across
    # the batch; only the (much smaller) xflat block is re-streamed.
    # TODO(synk): at production ResNet sizes (Cin~2048, Cout=2048) add a
    # trailing "arbitrary" Cin-reduction grid axis (bf16 Cin tiles ~512 on v7x
    # with its 64 MiB VMEM, >=1024 on v6e with a raised vmem_limit_bytes),
    # widen cout_tile to 256 on v6e/v7x (keep 128 on v5e), and fold several
    # batch elements into the matmul M dimension when N > 1.
    out_flat = pl.pallas_call(
        kernel,
        out_shape=jax.ShapeDtypeStruct((N, R, Cout_p), jnp.float32),
        grid=(n_t, N),
        in_specs=[
            pl.BlockSpec((1, (H + 2) * Wp_a, Cin_p), lambda j, n: (n, 0, 0)),
            pl.BlockSpec((3, Cin_p, 3 * Ct), lambda j, n: (0, 0, j)),
            pl.BlockSpec((1, Ct), lambda j, n: (0, j)),
        ],
        out_specs=pl.BlockSpec((1, R, Ct), lambda j, n: (n, 0, j)),
        scratch_shapes=[pltpu.VMEM((R, Ct), jnp.float32)],
        compiler_params=pltpu.CompilerParams(
            dimension_semantics=("parallel", "parallel")),
        cost_estimate=cost,
    )(xflat, w_packed, b_p)

    # (N, R, Cout_p) -> (N, H, Wp_a, Cout_p); crop real columns/channels; NCHW.
    out = out_flat.reshape(N, H, Wp_a, Cout_p)[:, :, 1:1 + W, :Cout]
    return jnp.transpose(out, (0, 3, 1, 2)).astype(x_nchw.dtype)


# ------------------------------------------------------------------------
# Analytic contribution of the tiled noise to the 3x3 conv (padding=1).
# ------------------------------------------------------------------------
def noise_term(z, wz_oihw, H, W):
    """conv3x3(tile(z)) computed in closed form.

    The tiled noise is spatially constant, so its conv response at pixel
    (i, j) is z @ (sum of the Wz taps whose receptive field stays inside the
    image); only the zero-padding border changes which taps are summed.
    """
    g = jnp.einsum('nl,clhw->nhwc', z, wz_oihw,
                   precision=jax.lax.Precision.HIGHEST)           # (N,3,3,Cout)
    ih = jnp.arange(H)[:, None] + jnp.arange(3)[None, :] - 1
    rh = ((ih >= 0) & (ih < H)).astype(z.dtype)                   # (H,3) row validity
    iw = jnp.arange(W)[:, None] + jnp.arange(3)[None, :] - 1
    cw = ((iw >= 0) & (iw < W)).astype(z.dtype)                   # (W,3) col validity
    return jnp.einsum('ih,jw,nhwc->ncij', rh, cw, g,
                      precision=jax.lax.Precision.HIGHEST)        # (N,Cout,H,W)


def noise_conv_ref(x_last, z, w_oihw, b):
    """XLA f32 reference of the original op: conv3x3(cat(x_last, tile(z))) + b."""
    N, C, H, W = x_last.shape
    L = z.shape[1]
    z_tiled = jnp.broadcast_to(z[:, :, None, None], (N, L, H, W))
    xcat = jnp.concatenate([x_last, z_tiled], axis=1)
    out = jax.lax.conv_general_dilated(
        xcat, w_oihw, window_strides=(1, 1), padding=((1, 1), (1, 1)),
        dimension_numbers=('NCHW', 'OIHW', 'NCHW'),
        precision=jax.lax.Precision.HIGHEST)
    return out + b[None, :, None, None]


# ------------------------------------------------------------------------
# Stand-ins for components whose class definitions are not provided in the
# reference (ResNetEncoder / BTSDecoder / RegressionHead etc.).
# ------------------------------------------------------------------------
def encoder_standin(params, x_img):
    # TODO(synk): ResNetEncoder definition not provided; deterministic multi-scale stand-in.
    N, C, H, W = x_img.shape
    feats = []
    for i, (ch, stride) in enumerate(ENC_FEAT_SMALL):
        h, w = H // stride, W // stride
        pooled = x_img.reshape(N, C, h, stride, w, stride).mean(axis=(3, 5))
        proj = params['enc_proj'][i]
        f = jnp.einsum('oc,nchw->nohw', proj, pooled)
        feats.append(jax.nn.relu(f))
    return feats


def decoder_standin(params, feats):
    # TODO(synk): SimpleDecoder/BTSDecoder definitions not provided; 1x1-conv stand-in.
    x = feats[-1]
    y = jnp.einsum('oc,nchw->nohw', params['dec_w'], x) + params['dec_b'][None, :, None, None]
    return jax.nn.relu(y)


def regressor_standin(params, x):
    # TODO(synk): RegressionHead definition not provided; sigmoid-depth stand-in returning a dict.
    y = jnp.einsum('oc,nchw->nohw', params['reg_w'], x) + params['reg_b'][None, :, None, None]
    return {'pred': MAX_DEPTH * jax.nn.sigmoid(y)}


def dict_stack(xs, exception='scales'):
    out = {}
    for k in xs[0].keys():
        if k == exception:
            out[k] = xs[0][k]
        else:
            out[k] = jnp.stack([x[k] for x in xs])
    return out


# ------------------------------------------------------------------------
# Deterministic parameter init (shapes implied by the module's __init__).
# noise_conv: Conv2d(C_last + latent_dim, C_last, kernel_size=3, padding=1)
# ------------------------------------------------------------------------
def init_params(key):
    ks = jax.random.split(key, 9)
    C_last = ENC_FEAT_SMALL[-1][0]
    params = {
        'enc_proj': [0.1 * jax.random.normal(ks[i], (ch, 3), jnp.float32)
                     for i, (ch, _) in enumerate(ENC_FEAT_SMALL)],
        'noise_conv_w': 0.05 * jax.random.normal(
            ks[5], (C_last, C_last + LATENT_DIM, 3, 3), jnp.float32),
        'noise_conv_b': 0.01 * jax.random.normal(ks[6], (C_last,), jnp.float32),
        'dec_w': 0.1 * jax.random.normal(ks[7], (DEC_FEAT, C_last), jnp.float32),
        'dec_b': jnp.zeros((DEC_FEAT,), jnp.float32),
        'reg_w': 0.1 * jax.random.normal(ks[8], (1, DEC_FEAT), jnp.float32),
        'reg_b': jnp.zeros((1,), jnp.float32),
    }
    return params


# ------------------------------------------------------------------------
# NoiseInjectedDepthEstimationModule.forward
# ------------------------------------------------------------------------
def noise_injected_forward(params, x_img, key, fw_pass=FW_PASS):
    feats = encoder_standin(params, x_img)
    x_last = feats[-1]                               # == x_[-1].clone()
    C = x_last.shape[1]
    H, W = x_last.shape[2], x_last.shape[3]
    w = params['noise_conv_w']                       # (C, C+L, 3, 3)
    wx, wz = w[:, :C], w[:, C:]

    # Hoisted: the x-dependent conv (+ bias) is pass-invariant -> run the
    # Pallas kernel ONCE instead of fw_pass times.
    base = conv3x3_bias_pallas(x_last, wx, params['noise_conv_b'])

    xs = []
    keys = jax.random.split(key, fw_pass)
    for i in range(fw_pass):
        # TODO(synk): torch.randn stream replaced by jax.random.normal (different RNG).
        z = jax.random.normal(keys[i], (x_img.shape[0], LATENT_DIM), jnp.float32)
        # == noise_conv(cat(x_last, tile(z))): base conv + analytic noise term.
        x_last_ = base + noise_term(z, wz, H, W)
        feats_i = list(feats)
        feats_i[-1] = x_last_
        dec = decoder_standin(params, feats_i)
        pred = regressor_standin(params, dec)
        xs.append(pred)
    return dict_stack(xs, exception='scales')


if __name__ == "__main__":
    key = jax.random.PRNGKey(0)
    k_param, k_img, k_z, k_fw = jax.random.split(key, 4)

    params = init_params(k_param)
    x_img = jax.random.normal(k_img, (2, 3, 128, 128), jnp.float32)   # NCHW image

    feats = encoder_standin(params, x_img)
    x_last = feats[-1]                                                # (2, 64, 4, 4)
    C, H, W = x_last.shape[1], x_last.shape[2], x_last.shape[3]
    w_full = params['noise_conv_w']
    wx, wz = w_full[:, :C], w_full[:, C:]
    b = params['noise_conv_b']
    z = jax.random.normal(k_z, (x_img.shape[0], LATENT_DIM), jnp.float32)

    # --- check 1: Pallas x-conv vs XLA conv with MATCHING bf16 operands /
    #     f32 accumulation (isolates the kernel; tight tolerance) ---
    base_pallas = conv3x3_bias_pallas(x_last, wx, b)
    base_ref = jax.lax.conv_general_dilated(
        x_last.astype(jnp.bfloat16), wx.astype(jnp.bfloat16),
        window_strides=(1, 1), padding=((1, 1), (1, 1)),
        dimension_numbers=('NCHW', 'OIHW', 'NCHW'),
        preferred_element_type=jnp.float32) + b[None, :, None, None]
    assert base_pallas.shape == base_ref.shape
    assert jnp.allclose(base_pallas, base_ref, rtol=1e-3, atol=1e-4), "x-conv mismatch"

    # --- check 2: split (bf16 base + analytic noise) vs full f32 concat-conv
    #     reference.  Tolerance consciously set for bf16 operand quantization
    #     of the (small-magnitude) x path; the noise term dominates the output. ---
    out_split = base_pallas + noise_term(z, wz, H, W)
    out_ref = noise_conv_ref(x_last, z, w_full, b)
    assert out_split.shape == out_ref.shape
    assert jnp.allclose(out_split, out_ref, rtol=1e-3, atol=1e-3), "noise_conv mismatch"

    # --- full forward (fw_pass noisy passes, stacked by dict_stack) ---
    fwd = jax.jit(noise_injected_forward, static_argnames=('fw_pass',))
    result = fwd(params, x_img, k_fw, fw_pass=FW_PASS)
    jax.block_until_ready(result)
    assert result['pred'].shape[0] == FW_PASS
    print("KERNEL_OK")
</pallas_src>

<mosaic_0001>
module attributes {stable_mosaic.version = 11 : i64} {
  func.func @kernel(%arg0: i32, %arg1: i32, %arg2: memref<1x48x128xbf16, #tpu.memory_space<vmem>>, %arg3: memref<3x128x384xbf16, #tpu.memory_space<vmem>>, %arg4: memref<1x128xf32, #tpu.memory_space<vmem>>, %arg5: memref<1x32x128xf32, #tpu.memory_space<vmem>>, %arg6: memref<32x128xf32, #tpu.memory_space<vmem>>) attributes {dimension_semantics = [#tpu.dimension_semantics<parallel>, #tpu.dimension_semantics<parallel>], iteration_bounds = array<i64: 1, 2>, scalar_prefetch = 0 : i64, scratch_operands = 1 : i64, tpu.core_type = #tpu.core_type<tc>, window_params = [{transform_indices = @transform_0, window_bounds = array<i64: 1, 48, 128>}, {transform_indices = @transform_1, window_bounds = array<i64: 3, 128, 384>}, {transform_indices = @transform_2, window_bounds = array<i64: 1, 128>}, {transform_indices = @transform_3, window_bounds = array<i64: 1, 32, 128>}]} {
    %c0 = arith.constant 0 : index
    %c0_0 = arith.constant 0 : index
    %0 = vector.load %arg4[%c0, %c0_0] : memref<1x128xf32, #tpu.memory_space<vmem>>, vector<1x128xf32>
    %1 = vector.shape_cast %0 : vector<1x128xf32> to vector<1x128xf32>
    %2 = vector.broadcast %1 : vector<1x128xf32> to vector<32x128xf32>
    %c0_1 = arith.constant 0 : index
    %c0_2 = arith.constant 0 : index
    %3 = vector.load %arg6[%c0_1, %c0_2] : memref<32x128xf32, #tpu.memory_space<vmem>>, vector<32x128xf32>
    tpu.vector_store %arg6[%c0_1, %c0_2], %2 {strides = array<i32>} : memref<32x128xf32, #tpu.memory_space<vmem>>, vector<32x128xf32>,
    %c0_3 = arith.constant 0 : index
    %c0_4 = arith.constant 0 : index
    %c0_5 = arith.constant 0 : index
    %4 = vector.load %arg2[%c0_3, %c0_4, %c0_5] : memref<1x48x128xbf16, #tpu.memory_space<vmem>>, vector<1x32x128xbf16>
    %5 = vector.shape_cast %4 : vector<1x32x128xbf16> to vector<32x128xbf16>
    %c0_6 = arith.constant 0 : index
    %c0_7 = arith.constant 0 : index
    %c0_8 = arith.constant 0 : index
    %6 = vector.load %arg3[%c0_6, %c0_7, %c0_8] : memref<3x128x384xbf16, #tpu.memory_space<vmem>>, vector<1x128x384xbf16>
    %7 = vector.shape_cast %6 : vector<1x128x384xbf16> to vector<128x384xbf16>
    %cst = arith.constant dense<0.000000e+00> : vector<32x384xf32>
    %8 = tpu.matmul %5, %7, %cst {dimension_numbers = #tpu.dot_dimension_numbers<[1], [0], [0], [1], [0, 0, 1, 1], [], []>} : vector<32x128xbf16>, vector<128x384xbf16>, vector<32x384xf32> -> vector<32x384xf32>
    %c0_9 = arith.constant 0 : index
    %c0_10 = arith.constant 0 : index
    %9 = vector.load %arg6[%c0_9, %c0_10] : memref<32x128xf32, #tpu.memory_space<vmem>>, vector<32x128xf32>
    %10 = vector.extract_strided_slice %8 {offsets = [0, 0], sizes = [32, 128], strides = [1, 1]} : vector<32x384xf32> to vector<32x128xf32>
    %c1_i32 = arith.constant 1 : i32
    %11 = tpu.dynamic_rotate %10 by %c1_i32 dim 0 : vector<32x128xf32>, i32 -> vector<32x128xf32>
    %12 = vector.extract_strided_slice %8 {offsets = [0, 128], sizes = [32, 128], strides = [1, 1]} : vector<32x384xf32> to vector<32x128xf32>
    %13 = arith.addf %11, %12 : vector<32x128xf32>
    %14 = vector.extract_strided_slice %8 {offsets = [0, 256], sizes = [32, 128], strides = [1, 1]} : vector<32x384xf32> to vector<32x128xf32>
    %c31_i32 = arith.constant 31 : i32
    %15 = tpu.dynamic_rotate %14 by %c31_i32 dim 0 : vector<32x128xf32>, i32 -> vector<32x128xf32>
    %16 = arith.addf %13, %15 : vector<32x128xf32>
    %17 = arith.addf %9, %16 : vector<32x128xf32>
    %c0_11 = arith.constant 0 : index
    %c0_12 = arith.constant 0 : index
    %18 = vector.load %arg6[%c0_11, %c0_12] : memref<32x128xf32, #tpu.memory_space<vmem>>, vector<32x128xf32>
    tpu.vector_store %arg6[%c0_11, %c0_12], %17 {strides = array<i32>} : memref<32x128xf32, #tpu.memory_space<vmem>>, vector<32x128xf32>,
    %c0_13 = arith.constant 0 : index
    %c8 = arith.constant 8 : index
    %c0_14 = arith.constant 0 : index
    %19 = vector.load %arg2[%c0_13, %c8, %c0_14] : memref<1x48x128xbf16, #tpu.memory_space<vmem>>, vector<1x32x128xbf16>
    %20 = vector.shape_cast %19 : vector<1x32x128xbf16> to vector<32x128xbf16>
    %c1 = arith.constant 1 : index
    %c0_15 = arith.constant 0 : index
    %c0_16 = arith.constant 0 : index
    %21 = vector.load %arg3[%c1, %c0_15, %c0_16] : memref<3x128x384xbf16, #tpu.memory_space<vmem>>, vector<1x128x384xbf16>
    %22 = vector.shape_cast %21 : vector<1x128x384xbf16> to vector<128x384xbf16>
    %cst_17 = arith.constant dense<0.000000e+00> : vector<32x384xf32>
    %23 = tpu.matmul %20, %22, %cst_17 {dimension_numbers = #tpu.dot_dimension_numbers<[1], [0], [0], [1], [0, 0, 1, 1], [], []>} : vector<32x128xbf16>, vector<128x384xbf16>, vector<32x384xf32> -> vector<32x384xf32>
    %c0_18 = arith.constant 0 : index
    %c0_19 = arith.constant 0 : index
    %24 = vector.load %arg6[%c0_18, %c0_19] : memref<32x128xf32, #tpu.memory_space<vmem>>, vector<32x128xf32>
    %25 = vector.extract_strided_slice %23 {offsets = [0, 0], sizes = [32, 128], strides = [1, 1]} : vector<32x384xf32> to vector<32x128xf32>
    %c1_i32_20 = arith.constant 1 : i32
    %26 = tpu.dynamic_rotate %25 by %c1_i32_20 dim 0 : vector<32x128xf32>, i32 -> vector<32x128xf32>
    %27 = vector.extract_strided_slice %23 {offsets = [0, 128], sizes = [32, 128], strides = [1, 1]} : vector<32x384xf32> to vector<32x128xf32>
    %28 = arith.addf %26, %27 : vector<32x128xf32>
    %29 = vector.extract_strided_slice %23 {offsets = [0, 256], sizes = [32, 128], strides = [1, 1]} : vector<32x384xf32> to vector<32x128xf32>
    %c31_i32_21 = arith.constant 31 : i32
    %30 = tpu.dynamic_rotate %29 by %c31_i32_21 dim 0 : vector<32x128xf32>, i32 -> vector<32x128xf32>
    %31 = arith.addf %28, %30 : vector<32x128xf32>
    %32 = arith.addf %24, %31 : vector<32x128xf32>
    %c0_22 = arith.constant 0 : index
    %c0_23 = arith.constant 0 : index
    %33 = vector.load %arg6[%c0_22, %c0_23] : memref<32x128xf32, #tpu.memory_space<vmem>>, vector<32x128xf32>
    tpu.vector_store %arg6[%c0_22, %c0_23], %32 {strides = array<i32>} : memref<32x128xf32, #tpu.memory_space<vmem>>, vector<32x128xf32>,
    %c0_24 = arith.constant 0 : index
    %c16 = arith.constant 16 : index
    %c0_25 = arith.constant 0 : index
    %34 = vector.load %arg2[%c0_24, %c16, %c0_25] : memref<1x48x128xbf16, #tpu.memory_space<vmem>>, vector<1x32x128xbf16>
    %35 = vector.shape_cast %34 : vector<1x32x128xbf16> to vector<32x128xbf16>
    %c2 = arith.constant 2 : index
    %c0_26 = arith.constant 0 : index
    %c0_27 = arith.constant 0 : index
    %36 = vector.load %arg3[%c2, %c0_26, %c0_27] : memref<3x128x384xbf16, #tpu.memory_space<vmem>>, vector<1x128x384xbf16>
    %37 = vector.shape_cast %36 : vector<1x128x384xbf16> to vector<128x384xbf16>
    %cst_28 = arith.constant dense<0.000000e+00> : vector<32x384xf32>
    %38 = tpu.matmul %35, %37, %cst_28 {dimension_numbers = #tpu.dot_dimension_numbers<[1], [0], [0], [1], [0, 0, 1, 1], [], []>} : vector<32x128xbf16>, vector<128x384xbf16>, vector<32x384xf32> -> vector<32x384xf32>
    %c0_29 = arith.constant 0 : index
    %c0_30 = arith.constant 0 : index
    %39 = vector.load %arg6[%c0_29, %c0_30] : memref<32x128xf32, #tpu.memory_space<vmem>>, vector<32x128xf32>
    %40 = vector.extract_strided_slice %38 {offsets = [0, 0], sizes = [32, 128], strides = [1, 1]} : vector<32x384xf32> to vector<32x128xf32>
    %c1_i32_31 = arith.constant 1 : i32
    %41 = tpu.dynamic_rotate %40 by %c1_i32_31 dim 0 : vector<32x128xf32>, i32 -> vector<32x128xf32>
    %42 = vector.extract_strided_slice %38 {offsets = [0, 128], sizes = [32, 128], strides = [1, 1]} : vector<32x384xf32> to vector<32x128xf32>
    %43 = arith.addf %41, %42 : vector<32x128xf32>
    %44 = vector.extract_strided_slice %38 {offsets = [0, 256], sizes = [32, 128], strides = [1, 1]} : vector<32x384xf32> to vector<32x128xf32>
    %c31_i32_32 = arith.constant 31 : i32
    %45 = tpu.dynamic_rotate %44 by %c31_i32_32 dim 0 : vector<32x128xf32>, i32 -> vector<32x128xf32>
    %46 = arith.addf %43, %45 : vector<32x128xf32>
    %47 = arith.addf %39, %46 : vector<32x128xf32>
    %c0_33 = arith.constant 0 : index
    %c0_34 = arith.constant 0 : index
    %48 = vector.load %arg6[%c0_33, %c0_34] : memref<32x128xf32, #tpu.memory_space<vmem>>, vector<32x128xf32>
    tpu.vector_store %arg6[%c0_33, %c0_34], %47 {strides = array<i32>} : memref<32x128xf32, #tpu.memory_space<vmem>>, vector<32x128xf32>,
    %c0_35 = arith.constant 0 : index
    %c0_36 = arith.constant 0 : index
    %49 = vector.load %arg6[%c0_35, %c0_36] : memref<32x128xf32, #tpu.memory_space<vmem>>, vector<32x128xf32>
    %c0_37 = arith.constant 0 : index
    %c0_38 = arith.constant 0 : index
    %c0_39 = arith.constant 0 : index
    %50 = vector.load %arg5[%c0_37, %c0_38, %c0_39] : memref<1x32x128xf32, #tpu.memory_space<vmem>>, vector<1x32x128xf32>
    %51 = vector.shape_cast %50 : vector<1x32x128xf32> to vector<32x128xf32>
    %52 = vector.shape_cast %49 : vector<32x128xf32> to vector<1x32x128xf32>
    tpu.vector_store %arg5[%c0_37, %c0_38, %c0_39], %52 {strides = array<i32>} : memref<1x32x128xf32, #tpu.memory_space<vmem>>, vector<1x32x128xf32>,
    return
  }
  func.func @transform_0(%arg0: i32, %arg1: i32) -> (i32, i32, i32) {
    %c0_i32 = arith.constant 0 : i32
    %c0_i32_0 = arith.constant 0 : i32
    %c0_i32_1 = arith.constant 0 : i32
    return %arg1, %c0_i32, %c0_i32_0 : i32, i32, i32
  }
  func.func @transform_1(%arg0: i32, %arg1: i32) -> (i32, i32, i32) {
    %c0_i32 = arith.constant 0 : i32
    %c0_i32_0 = arith.constant 0 : i32
    %c0_i32_1 = arith.constant 0 : i32
    return %c0_i32, %c0_i32_0, %arg0 : i32, i32, i32
  }
  func.func @transform_2(%arg0: i32, %arg1: i32) -> (i32, i32) {
    %c0_i32 = arith.constant 0 : i32
    %c0_i32_0 = arith.constant 0 : i32
    return %c0_i32, %arg0 : i32, i32
  }
  func.func @transform_3(%arg0: i32, %arg1: i32) -> (i32, i32, i32) {
    %c0_i32 = arith.constant 0 : i32
    %c0_i32_0 = arith.constant 0 : i32
    return %arg1, %c0_i32, %arg0 : i32, i32, i32
  }
}

</mosaic_0001>

<llo_original>
// kernel: tpu_custom_call.1
$region0: #{tpu_custom_call.1}
  #allocation0 [shape = 'u32[]', space=smem, size = 0x4, offset = 0x4, fixed_abs, tag = 'smem constant byte address 0x4 - core index']
  #allocation1 [shape = 'u32[144,128]{1,0:T(1,128)}', space=vmem, size = 0x12000, scoped, tag = 'internal scratch']
  #allocation2 [shape = 'f32[32,128]{1,0:T(8,128)}', space=vmem, size = 0x4000, scoped, tag = 'scratch operand']
  %s0 = inlined_call_operand.hbm [shape: bf16[2,48,128], index: 0, kind: input, shape index: {}]
  %s1 = inlined_call_operand.hbm [shape: bf16[3,128,384], index: 1, kind: input, shape index: {}]
  %s2 = inlined_call_operand.vmem [shape: f32[1,128], index: 2, kind: input, shape index: {}]
  %s3 = inlined_call_operand.hbm [shape: f32[2,32,128], index: 3, kind: output, shape index: {}]
  %s4 = sld [smem:[#allocation0]]
  $region53: #{tpu_custom_call.1} parent=0
    _
  %s6 = ssub.s32 1, %s4
  %s7 = scalar_select 0, %s6, %s4
  $region1: #{tpu_custom_call.1} parent=0
    #allocation3 [shape = 'u8[24576]{0}', space=vmem, size = 0x6000, scoped, tag = 'input window, operand 0']
    #allocation4 [shape = 's32[2]{0}', space=sflag, size = 0x8, scoped, tag = 'scoped memory for tpu_custom_call.1']
    #allocation5 [shape = 's32[2]{0}', space=sflag, size = 0x8, scoped, tag = 'scoped memory for tpu_custom_call.1']
    #allocation6 [shape = 'u8[294912]{0}', space=vmem, size = 0x48000, scoped, tag = 'input window, operand 1, single buffered']
    #allocation7 [shape = 's32[1]{0}', space=sflag, size = 0x4, scoped, tag = 'scoped memory for tpu_custom_call.1']
    #allocation8 [shape = 'u8[32768]{0}', space=vmem, size = 0x8000, scoped, tag = 'output window, operand 0']
    %8 = vsyncpa [#allocation4], 0
    %s9 = scalar_lea.sflag [#allocation4], 1
    %10 = vsyncpa %s9, 0
    %11 = vsyncpa [#allocation7], 0
    %12 = vsyncpa [#allocation5], 0
    %s13 = scalar_lea.sflag [#allocation5], 1
    %14 = vsyncpa %s13, 0
    loop: start=0, step=1, limit=4
    $region2: #{tpu_custom_call.1} parent=1 // loop_pre_header
      _
    $region3: #{tpu_custom_call.1} parent=1 // loop_header
      %s16 = sphi 0, %s20
      %p17 = scmp.ge.s32.totalorder %s16, 4
      %s23 = sphi 0, %s35
      %s24 = sphi 0, %s31
      %s25 = sphi 0, %s23
      %s26 = sphi 0, %s24
      %s27 = sphi 0, %s25
      %s28 = sphi 0, %s26
      %s38 = sphi 0, %s40
      %s41 = sphi 0, %s38
      %s42 = sphi 0, %s41
      %s58 = sphi 0, %s42
      %s64 = sphi 0, %s66
      %s67 = sphi 0, %s64
      %s68 = sphi 0, %s67
      %s84 = sphi 0, %s68
      %s90 = sphi 0, %s92
      %s93 = sphi 0, %s90
      %s94 = sphi 0, %s93
      %s110 = sphi 0, %s94
      %s118 = sphi 0, %s120
      %s121 = sphi 0, %s118
      %s122 = sphi 0, %s121
      %s138 = sphi 0, %s122
    $region4: #{tpu_custom_call.1} parent=1 // loop_header_branch
      %19 = sbr.rel (%p17) target = $region8
    $region5: #{tpu_custom_call.1} parent=1 // loop_body
      %s21 = ssub.s32 %s16, 1
      %s22 = ssub.s32 %s16, 2
      %s29 = sadd.s32 1, %s24
      %p30 = scmp.ge.s32.totalorder %s29, 2
      %s31 = scalar_select %p30, 0, %s29
      %s32 = sadd.s32 1, %s23
      %s33 = scalar_select %p30, %s32, %s23
      %p34 = scmp.ge.s32.totalorder %s33, 1
      %s35 = scalar_select %p34, 0, %s33
      %s36 = ssub.s32 %s24, %s31
      %p37 = scmp.eq.s32.totalorder %s36, 0
      %s39 = sadd.s32 %s38, 1
      %s40 = scalar_select %p37, %s38, %s39
      %p43 = pneg %p37
      %p44 = scmp.eq.s32.totalorder %s16, 1
      %p45 = por %p43, %p44
      %p46 = scmp.ne.s32.totalorder %s38, %s41
      %p47 = scmp.eq.s32.totalorder %s16, 0
      %p48 = por %p46, %p47
      %p49 = scmp.ne.s32.totalorder %s38, %s41
      %p50 = scmp.eq.s32.totalorder %s21, 1
      %p51 = por %p49, %p50
      %p52 = scmp.ne.s32.totalorder %s41, %s42
      %p53 = scmp.eq.s32.totalorder %s21, 0
      %p54 = por %p52, %p53
      %p55 = scmp.ne.s32.totalorder %s41, %s42
      %p56 = scmp.eq.s32.totalorder %s22, 1
      %p57 = por %p55, %p56
      %p59 = scmp.ne.s32.totalorder %s42, %s58
      %p60 = scmp.eq.s32.totalorder %s22, 0
      %p61 = por %p59, %p60
      %s62 = ssub.s32 %s23, %s35
      %p63 = scmp.eq.s32.totalorder %s62, 0
      %s65 = sadd.s32 %s64, 1
      %s66 = scalar_select %p63, %s64, %s65
      %p69 = pneg %p63
      %p70 = scmp.eq.s32.totalorder %s16, 1
      %p71 = por %p69, %p70
      %p72 = scmp.ne.s32.totalorder %s64, %s67
      %p73 = scmp.eq.s32.totalorder %s16, 0
      %p74 = por %p72, %p73
      %p75 = scmp.ne.s32.totalorder %s64, %s67
      %p76 = scmp.eq.s32.totalorder %s21, 1
      %p77 = por %p75, %p76
      %p78 = scmp.ne.s32.totalorder %s67, %s68
      %p79 = scmp.eq.s32.totalorder %s21, 0
      %p80 = por %p78, %p79
      %p81 = scmp.ne.s32.totalorder %s67, %s68
      %p82 = scmp.eq.s32.totalorder %s22, 1
      %p83 = por %p81, %p82
      %p85 = scmp.ne.s32.totalorder %s68, %s84
      %p86 = scmp.eq.s32.totalorder %s22, 0
      %p87 = por %p85, %p86
      %s88 = ssub.s32 %s23, %s35
      %p89 = scmp.eq.s32.totalorder %s88, 0
      %s91 = sadd.s32 %s90, 1
      %s92 = scalar_select %p89, %s90, %s91
      %p95 = pneg %p89
      %p96 = scmp.eq.s32.totalorder %s16, 1
      %p97 = por %p95, %p96
      %p98 = scmp.ne.s32.totalorder %s90, %s93
      %p99 = scmp.eq.s32.totalorder %s16, 0
      %p100 = por %p98, %p99
      %p101 = scmp.ne.s32.totalorder %s90, %s93
      %p102 = scmp.eq.s32.totalorder %s21, 1
      %p103 = por %p101, %p102
      %p104 = scmp.ne.s32.totalorder %s93, %s94
      %p105 = scmp.eq.s32.totalorder %s21, 0
      %p106 = por %p104, %p105
      %p107 = scmp.ne.s32.totalorder %s93, %s94
      %p108 = scmp.eq.s32.totalorder %s22, 1
      %p109 = por %p107, %p108
      %p111 = scmp.ne.s32.totalorder %s94, %s110
      %p112 = scmp.eq.s32.totalorder %s22, 0
      %p113 = por %p111, %p112
      %s114 = ssub.s32 %s24, %s31
      %s115 = ssub.s32 %s23, %s35
      %s116 = sor.u32 %s114, %s115
      %p117 = scmp.eq.s32.totalorder %s116, 0
      %s119 = sadd.s32 %s118, 1
      %s120 = scalar_select %p117, %s118, %s119
      %p123 = pneg %p117
      %p124 = scmp.eq.s32.totalorder %s16, 1
      %p125 = por %p123, %p124
      %p126 = scmp.ne.s32.totalorder %s118, %s121
      %p127 = scmp.eq.s32.totalorder %s16, 0
      %p128 = por %p126, %p127
      %p129 = scmp.ne.s32.totalorder %s118, %s121
      %p130 = scmp.eq.s32.totalorder %s21, 1
      %p131 = por %p129, %p130
      %p132 = scmp.ne.s32.totalorder %s121, %s122
      %p133 = scmp.eq.s32.totalorder %s21, 0
      %p134 = por %p132, %p133
      %p135 = scmp.ne.s32.totalorder %s121, %s122
      %p136 = scmp.eq.s32.totalorder %s22, 1
      %p137 = por %p135, %p136
      %p139 = scmp.ne.s32.totalorder %s122, %s138
      %p140 = scmp.eq.s32.totalorder %s22, 0
      %p141 = por %p139, %p140
      %p142 = scmp.le.s32.totalorder 1, %s16
      %p143 = scmp.lt.s32.totalorder %s16, 3
      %p144 = pnand %p142, %p143
      %p145 = pneg %p144
      // Predicated region
      $region9: #{tpu_custom_call.1} parent=5 // pred_check
        _
      $region10: #{tpu_custom_call.1} parent=5 // pred_check_branch
        %147 = sbr.rel (%p144) target = $region12
      $region11: #{tpu_custom_call.1} parent=5 // pred_region
        %s148 = ssub.s32 %s16, 1
        // Predicated region
        $region13: #{tpu_custom_call.1} parent=11 // pred_check
          %p149 = pneg %p80
        $region14: #{tpu_custom_call.1} parent=11 // pred_check_branch
          %151 = sbr.rel (%p149) target = $region16
        $region15: #{tpu_custom_call.1} parent=11 // pred_region
          %s152 = smul.u32 3, %s25
          %s154 = ssub.s32 9216, 9216
          %155 = vsyncadd [#allocation7], %s154
          %s156 = smul.addr %s152, 64
          %s157 = scalar_lea.hbm %s1, %s156
          %s158 = sshll.u32 [#allocation6], 4
          %s159 = int_to_ptr.vmem [resolvable:$true] %s158
          %164 = dma.hbm_to_vmem [thread:$0]  %s157, 9216, %s159, [#allocation7], 192, 192, 12
        $region16: #{tpu_custom_call.1} parent=11 // pred_fallthru
          _
        // Predicated region
        $region17: #{tpu_custom_call.1} parent=11 // pred_check
          %p165 = pneg %p106
        $region18: #{tpu_custom_call.1} parent=11 // pred_check_branch
          %167 = sbr.rel (%p165) target = $region20
        $region19: #{tpu_custom_call.1} parent=11 // pred_region
          %p168 = scmp.lt.s32.totalorder %s25, 0
          %s169 = scalar_select %p168, %s25, 0
          %s170 = scalar_lea.vmem %s2, %s169
        $region20: #{tpu_custom_call.1} parent=11 // pred_fallthru
          _
      $region12: #{tpu_custom_call.1} parent=5 // pred_fallthru
        _
      %p171 = scmp.lt.s32.totalorder %s16, 2
      // Predicated region
      $region21: #{tpu_custom_call.1} parent=5 // pred_check
        %p172 = pneg %p171
      $region22: #{tpu_custom_call.1} parent=5 // pred_check_branch
        %174 = sbr.rel (%p172) target = $region24
      $region23: #{tpu_custom_call.1} parent=5 // pred_region
        // Predicated region
        $region25: #{tpu_custom_call.1} parent=23 // pred_check
          %p175 = pneg %p48
        $region26: #{tpu_custom_call.1} parent=23 // pred_check_branch
          %177 = sbr.rel (%p175) target = $region28
        $region27: #{tpu_custom_call.1} parent=23 // pred_region
          %s178 = sand.u32 %s38, 1
          %s179 = scalar_lea.sflag [#allocation4], %s178
          %s180 = sand.u32 %s38, 1
          %s181 = smul.addr %s180, 24
          %s182 = scalar_lea.vmem [#allocation3], %s181
          %s184 = ssub.s32 384, 384
          %185 = vsyncadd %s179, %s184
          %s186 = smul.addr %s24, 6
          %s187 = smul.addr %s186, 64
          %s188 = scalar_lea.hbm %s0, %s187
          %s189 = sshll.u32 %s182, 4
          %s190 = int_to_ptr.vmem [resolvable:$true] %s189
          %195 = dma.hbm_to_vmem [thread:$0]  %s188, 384, %s190, %s179, 64, 64, 4
        $region28: #{tpu_custom_call.1} parent=23 // pred_fallthru
          _
      $region24: #{tpu_custom_call.1} parent=5 // pred_fallthru
        _
      %p196 = scmp.le.s32.totalorder 1, %s16
      %p197 = scmp.lt.s32.totalorder %s16, 3
      %p198 = pnand %p196, %p197
      %p199 = pneg %p198
      // Predicated region
      $region29: #{tpu_custom_call.1} parent=5 // pred_check
        _
      $region30: #{tpu_custom_call.1} parent=5 // pred_check_branch
        %201 = sbr.rel (%p198) target = $region32
      $region31: #{tpu_custom_call.1} parent=5 // pred_region
        %s202 = ssub.s32 %s16, 1
        %s203 = sand.u32 %s41, 1
        %s204 = scalar_lea.sflag [#allocation4], %s203
        %s205 = sand.u32 %s41, 1
        %s206 = smul.addr %s205, 24
        %s207 = scalar_lea.vmem [#allocation3], %s206
        // Predicated region
        $region33: #{tpu_custom_call.1} parent=31 // pred_check
          %p208 = pneg %p54
        $region34: #{tpu_custom_call.1} parent=31 // pred_check_branch
          %210 = sbr.rel (%p208) target = $region36
        $region35: #{tpu_custom_call.1} parent=31 // pred_region
          %211 = dma.done %s204, 384
        $region36: #{tpu_custom_call.1} parent=31 // pred_fallthru
          _
        // Predicated region
        $region37: #{tpu_custom_call.1} parent=31 // pred_check
          %p212 = pneg %p80
        $region38: #{tpu_custom_call.1} parent=31 // pred_check_branch
          %214 = sbr.rel (%p212) target = $region40
        $region39: #{tpu_custom_call.1} parent=31 // pred_region
          %215 = dma.done [#allocation7], 9216
        $region40: #{tpu_custom_call.1} parent=31 // pred_fallthru
          _
        %s216 = sand.u32 %s41, 1
        %s217 = scalar_lea.sflag [#allocation4], %s216
        %s218 = sand.u32 %s41, 1
        %s219 = smul.addr %s218, 24
        %s220 = scalar_lea.vmem [#allocation3], %s219
        %p221 = pneg %p54
        %p222 = pneg %p51
        %p223 = pneg %p80
        %p224 = pneg %p77
        %p225 = scmp.lt.s32.totalorder %s25, 0
        %s226 = scalar_select %p225, %s25, 0
        %s227 = scalar_lea.vmem %s2, %s226
        %p228 = pneg %p106
        %p229 = pneg %p103
        %p230 = pneg %p134
        %p231 = pneg %p131
        %s232 = sand.u32 %s121, 1
        %s233 = scalar_lea.sflag [#allocation5], %s232
        %s234 = sand.u32 %s121, 1
        %s235 = smul.addr %s234, 32
        %s236 = scalar_lea.vmem [#allocation8], %s235
        %s237 = smul.u32 3, %s25
        %p238 = scmp.lt.s32.totalorder %s25, 0
        %s239 = scalar_select %p238, %s25, 0
        %s240 = scalar_lea.vmem %s2, %s239
        %v242 = vld [vmem:[%s240] sm:$0x1]
        %v244 = vlaneseq
        %v245 = vshrl.u32 %v244, 7
        %v246 = vsub.s32 0, %v245
        %v247 = vrot.slane %v242, %v246
        %249 = vst [vmem:[#allocation2] sm:$0xff] %v247
        %250 = vst [vmem:[#allocation2 + $0x8] sm:$0xff] %v247
        %251 = vst [vmem:[#allocation2 + $0x10] sm:$0xff] %v247
        %252 = vst [vmem:[#allocation2 + $0x18] sm:$0xff] %v247
        %v253 = vld [vmem:[%s207] sm:$0xf]
        %v254 = vld [vmem:[%s207 + $0x4] sm:$0xf]
        %v255 = vld [vmem:[%s207 + $0x8] sm:$0xf]
        %v256 = vld [vmem:[%s207 + $0xc] sm:$0xf]
        %v257 = vld [vmem:[#allocation6] sm:$0xff]
        %v258 = vld [vmem:[#allocation6 + $0x8] sm:$0xf]
        %v259 = vld [vmem:[#allocation6 + $0xc] sm:$0xff]
        %v260 = vld [vmem:[#allocation6 + $0x14] sm:$0xf]
        %v261 = vld [vmem:[#allocation6 + $0x18] sm:$0xff]
        %v262 = vld [vmem:[#allocation6 + $0x20] sm:$0xf]
        %v263 = vld [vmem:[#allocation6 + $0x24] sm:$0xff]
        %v264 = vld [vmem:[#allocation6 + $0x2c] sm:$0xf]
        %v265 = vld [vmem:[#allocation6 + $0x30] sm:$0xff]
        %v266 = vld [vmem:[#allocation6 + $0x38] sm:$0xf]
        %v267 = vld [vmem:[#allocation6 + $0x3c] sm:$0xff]
        %v268 = vld [vmem:[#allocation6 + $0x44] sm:$0xf]
        %v269 = vld [vmem:[#allocation6 + $0x48] sm:$0xff]
        %v270 = vld [vmem:[#allocation6 + $0x50] sm:$0xf]
        %v271 = vld [vmem:[#allocation6 + $0x54] sm:$0xff]
        %v272 = vld [vmem:[#allocation6 + $0x5c] sm:$0xf]
        %v273 = vld [vmem:[#allocation6 + $0x60] sm:$0xff]
        %v274 = vld [vmem:[#allocation6 + $0x68] sm:$0xf]
        %v275 = vld [vmem:[#allocation6 + $0x6c] sm:$0xff]
        %v276 = vld [vmem:[#allocation6 + $0x74] sm:$0xf]
        %v277 = vld [vmem:[#allocation6 + $0x78] sm:$0xff]
        %v278 = vld [vmem:[#allocation6 + $0x80] sm:$0xf]
        %v279 = vld [vmem:[#allocation6 + $0x84] sm:$0xff]
        %v280 = vld [vmem:[#allocation6 + $0x8c] sm:$0xf]
        %v281 = vld [vmem:[#allocation6 + $0x90] sm:$0xff]
        %v282 = vld [vmem:[#allocation6 + $0x98] sm:$0xf]
        %v283 = vld [vmem:[#allocation6 + $0x9c] sm:$0xff]
        %v284 = vld [vmem:[#allocation6 + $0xa4] sm:$0xf]
        %v285 = vld [vmem:[#allocation6 + $0xa8] sm:$0xff]
        %v286 = vld [vmem:[#allocation6 + $0xb0] sm:$0xf]
        %v287 = vld [vmem:[#allocation6 + $0xb4] sm:$0xff]
        %v288 = vld [vmem:[#allocation6 + $0xbc] sm:$0xf]
        %v293 = vunpack.c.l.b16 %v253
        %v294 = vunpack.c.l.b16 %v254
        %v295 = vunpack.c.l.b16 %v255
        %v296 = vunpack.c.l.b16 %v256
        %v297 = vpack.c.b16 %v294, %v293
        %v298 = vpack.c.b16 %v296, %v295
        %v333 = vunpack.c.l.b16 %v257
        %v334 = vunpack.c.h.b16 %v257
        %v335 = vunpack.c.l.b16 %v258
        %v336 = vunpack.c.l.b16 %v259
        %v337 = vunpack.c.h.b16 %v259
        %v338 = vunpack.c.l.b16 %v260
        %v339 = vunpack.c.l.b16 %v261
        %v340 = vunpack.c.h.b16 %v261
        %v341 = vunpack.c.l.b16 %v262
        %v342 = vunpack.c.l.b16 %v263
        %v343 = vunpack.c.h.b16 %v263
        %v344 = vunpack.c.l.b16 %v264
        %v345 = vunpack.c.l.b16 %v265
        %v346 = vunpack.c.h.b16 %v265
        %v347 = vunpack.c.l.b16 %v266
        %v348 = vunpack.c.l.b16 %v267
        %v349 = vunpack.c.h.b16 %v267
        %v350 = vunpack.c.l.b16 %v268
        %v351 = vunpack.c.l.b16 %v269
        %v352 = vunpack.c.h.b16 %v269
        %v353 = vunpack.c.l.b16 %v270
        %v354 = vunpack.c.l.b16 %v271
        %v355 = vunpack.c.h.b16 %v271
        %v356 = vunpack.c.l.b16 %v272
        %v357 = vunpack.c.l.b16 %v273
        %v358 = vunpack.c.h.b16 %v273
        %v359 = vunpack.c.l.b16 %v274
        %v360 = vunpack.c.l.b16 %v275
        %v361 = vunpack.c.h.b16 %v275
        %v362 = vunpack.c.l.b16 %v276
        %v363 = vunpack.c.l.b16 %v277
        %v364 = vunpack.c.h.b16 %v277
        %v365 = vunpack.c.l.b16 %v278
        %v366 = vunpack.c.l.b16 %v279
        %v367 = vunpack.c.h.b16 %v279
        %v368 = vunpack.c.l.b16 %v280
        %v369 = vunpack.c.l.b16 %v281
        %v370 = vunpack.c.h.b16 %v281
        %v371 = vunpack.c.l.b16 %v282
        %v372 = vunpack.c.l.b16 %v283
        %v373 = vunpack.c.h.b16 %v283
        %v374 = vunpack.c.l.b16 %v284
        %v375 = vunpack.c.l.b16 %v285
        %v376 = vunpack.c.h.b16 %v285
        %v377 = vunpack.c.l.b16 %v286
        %v378 = vunpack.c.l.b16 %v287
        %v379 = vunpack.c.h.b16 %v287
        %v380 = vunpack.c.l.b16 %v288
        %v381 = vpack.c.b16 %v336, %v333
        %v382 = vpack.c.b16 %v337, %v334
        %v383 = vpack.c.b16 %v338, %v335
        %v384 = vpack.c.b16 %v342, %v339
        %v385 = vpack.c.b16 %v343, %v340
        %v386 = vpack.c.b16 %v344, %v341
        %v387 = vpack.c.b16 %v348, %v345
        %v388 = vpack.c.b16 %v349, %v346
        %v389 = vpack.c.b16 %v350, %v347
        %v390 = vpack.c.b16 %v354, %v351
        %v391 = vpack.c.b16 %v355, %v352
        %v392 = vpack.c.b16 %v356, %v353
        %v393 = vpack.c.b16 %v360, %v357
        %v394 = vpack.c.b16 %v361, %v358
        %v395 = vpack.c.b16 %v362, %v359
        %v396 = vpack.c.b16 %v366, %v363
        %v397 = vpack.c.b16 %v367, %v364
        %v398 = vpack.c.b16 %v368, %v365
        %v399 = vpack.c.b16 %v372, %v369
        %v400 = vpack.c.b16 %v373, %v370
        %v401 = vpack.c.b16 %v374, %v371
        %v402 = vpack.c.b16 %v378, %v375
        %v403 = vpack.c.b16 %v379, %v376
        %v404 = vpack.c.b16 %v380, %v377
        %429 = vmatprep.subr.bf16.mxu0 %v382
        %430 = vmatpush1.bf16.msra.mxu0 %v381
        %431 = vmatprep.subr.bf16.mxu0 %v385
        %432 = vmatpush1.bf16.msra.mxu0 %v384
        %433 = vmatprep.subr.bf16.mxu0 %v388
        %434 = vmatpush1.bf16.msra.mxu0 %v387
        %435 = vmatprep.subr.bf16.mxu0 %v391
        %436 = vmatpush1.bf16.msra.mxu0 %v390
        %437 = vmatprep.subr.bf16.mxu0 %v394
        %438 = vmatpush1.bf16.msra.mxu0 %v393
        %439 = vmatprep.subr.bf16.mxu0 %v397
        %440 = vmatpush1.bf16.msra.mxu0 %v396
        %441 = vmatprep.subr.bf16.mxu0 %v400
        %442 = vmatpush1.bf16.msra.mxu0 %v399
        %443 = vmatprep.subr.bf16.mxu0 %v403
        %444 = vmatpush1.bf16.msra.mxu0 %v402
        %445 = vmatprep.subr.bf16.mxu0 0
        %446 = vmatpush1.bf16.msra.mxu0 0
        %447 = vmatprep.subr.bf16.mxu0 0
        %448 = vmatpush1.bf16.msra.mxu0 0
        %449 = vmatprep.subr.bf16.mxu0 0
        %450 = vmatpush1.bf16.msra.mxu0 0
        %451 = vmatprep.subr.bf16.mxu0 0
        %452 = vmatpush1.bf16.msra.mxu0 0
        %453 = vmatprep.subr.bf16.mxu0 0
        %454 = vmatpush1.bf16.msra.mxu0 0
        %455 = vmatprep.subr.bf16.mxu0 0
        %456 = vmatpush1.bf16.msra.mxu0 0
        %457 = vmatprep.subr.bf16.mxu0 0
        %458 = vmatpush1.bf16.msra.mxu0 0
        %459 = vmatprep.subr.bf16.mxu0 0
        %460 = vmatpush1.bf16.msra.mxu0 0
        %461 = vmatprep.mubr.bf16.mxu0 0
        %462 = vmatmul.mubr.bf16.gmra.mrb[0].mxu0 %v297
        %v463 = vpop.f32.mrb[0].mxu0
        %v464 = vadd.f32 0.0, %v463
        %v465 = vpop.f32.mrb[0].mxu0
        %v466 = vadd.f32 0.0, %v465
        %v467 = vpop.f32.mrb[0].mxu0
        %v468 = vadd.f32 0.0, %v467
        %v469 = vpop.f32.mrb[0].mxu0
        %v470 = vadd.f32 0.0, %v469
        %471 = vmatprep.mubr.bf16.mxu0 0
        %472 = vmatmul.mubr.bf16.gmra.mrb[0].mxu0 %v298
        %v473 = vpop.f32.mrb[0].mxu0
        %v474 = vadd.f32 0.0, %v473
        %v475 = vpop.f32.mrb[0].mxu0
        %v476 = vadd.f32 0.0, %v475
        %v477 = vpop.f32.mrb[0].mxu0
        %v478 = vadd.f32 0.0, %v477
        %v479 = vpop.f32.mrb[0].mxu0
        %v480 = vadd.f32 0.0, %v479
        %481 = vdwg.mxu0
        %482 = vmatprep.subr.bf16.mxu0 0
        %483 = vmatpush1.bf16.msra.mxu0 %v383
        %484 = vmatprep.subr.bf16.mxu0 0
        %485 = vmatpush1.bf16.msra.mxu0 %v386
        %486 = vmatprep.subr.bf16.mxu0 0
        %487 = vmatpush1.bf16.msra.mxu0 %v389
        %488 = vmatprep.subr.bf16.mxu0 0
        %489 = vmatpush1.bf16.msra.mxu0 %v392
        %490 = vmatprep.subr.bf16.mxu0 0
        %491 = vmatpush1.bf16.msra.mxu0 %v395
        %492 = vmatprep.subr.bf16.mxu0 0
        %493 = vmatpush1.bf16.msra.mxu0 %v398
        %494 = vmatprep.subr.bf16.mxu0 0
        %495 = vmatpush1.bf16.msra.mxu0 %v401
        %496 = vmatprep.subr.bf16.mxu0 0
        %497 = vmatpush1.bf16.msra.mxu0 %v404
        %498 = vmatprep.subr.bf16.mxu0 0
        %499 = vmatpush1.bf16.msra.mxu0 0
        %500 = vmatprep.subr.bf16.mxu0 0
        %501 = vmatpush1.bf16.msra.mxu0 0
        %502 = vmatprep.subr.bf16.mxu0 0
        %503 = vmatpush1.bf16.msra.mxu0 0
        %504 = vmatprep.subr.bf16.mxu0 0
        %505 = vmatpush1.bf16.msra.mxu0 0
        %506 = vmatprep.subr.bf16.mxu0 0
        %507 = vmatpush1.bf16.msra.mxu0 0
        %508 = vmatprep.subr.bf16.mxu0 0
        %509 = vmatpush1.bf16.msra.mxu0 0
        %510 = vmatprep.subr.bf16.mxu0 0
        %511 = vmatpush1.bf16.msra.mxu0 0
        %512 = vmatprep.subr.bf16.mxu0 0
        %513 = vmatpush1.bf16.msra.mxu0 0
        %514 = vmatprep.mubr.bf16.mxu0 0
        %515 = vmatmul.mubr.bf16.gmra.mrb[0].mxu0 %v297
        %v516 = vpop.f32.mrb[0].mxu0
        %v517 = vadd.f32 0.0, %v516
        %v518 = vpop.f32.mrb[0].mxu0
        %v519 = vpop.f32.mrb[0].mxu0
        %v520 = vadd.f32 0.0, %v519
        %v521 = vpop.f32.mrb[0].mxu0
        %522 = vmatprep.mubr.bf16.mxu0 0
        %523 = vmatmul.mubr.bf16.gmra.mrb[0].mxu0 %v298
        %v524 = vpop.f32.mrb[0].mxu0
        %v525 = vadd.f32 0.0, %v524
        %v526 = vpop.f32.mrb[0].mxu0
        %v527 = vpop.f32.mrb[0].mxu0
        %v528 = vadd.f32 0.0, %v527
        %v529 = vpop.f32.mrb[0].mxu0
        %530 = vdwg.mxu0
        %v531 = vld [vmem:[#allocation2] sm:$0xff]
        %v532 = vld [vmem:[#allocation2 + $0x8] sm:$0xff]
        %v533 = vld [vmem:[#allocation2 + $0x10] sm:$0xff]
        %v534 = vld [vmem:[#allocation2 + $0x18] sm:$0xff]
        %v535 = vrot.slane %v464, 7
        %v536 = vrot.slane %v468, 7
        %v537 = vrot.slane %v474, 7
        %v538 = vrot.slane %v478, 7
        %v539 = vlaneseq
        %v540 = vshrl.u32 %v539, 7
        %vm541 = vcmp.lt.s32.totalorder %v540, 1
        %v542 = vsel %vm541, %v537, %v538
        %v543 = vsel %vm541, %v536, %v537
        %v544 = vsel %vm541, %v535, %v536
        %v545 = vsel %vm541, %v538, %v535
        %v546 = vadd.f32 %v545, %v466
        %v547 = vadd.f32 %v544, %v470
        %v548 = vadd.f32 %v543, %v476
        %v549 = vadd.f32 %v542, %v480
        %v550 = vrot.slane %v517, 1
        %v551 = vrot.slane %v520, 1
        %v552 = vrot.slane %v525, 1
        %v553 = vrot.slane %v528, 1
        %vm554 = vcmp.lt.s32.totalorder %v540, 7
        %v555 = vsel %vm554, %v552, %v553
        %v556 = vsel %vm554, %v551, %v552
        %v557 = vsel %vm554, %v550, %v551
        %v558 = vsel %vm554, %v553, %v550
        %v559 = vadd.f32 %v546, %v557
        %v560 = vadd.f32 %v547, %v556
        %v561 = vadd.f32 %v548, %v555
        %v562 = vadd.f32 %v549, %v558
        %v563 = vadd.f32 %v531, %v559
        %v564 = vadd.f32 %v532, %v560
        %v565 = vadd.f32 %v533, %v561
        %v566 = vadd.f32 %v534, %v562
        %567 = vst [vmem:[#allocation2] sm:$0xff] %v563
        %568 = vst [vmem:[#allocation2 + $0x8] sm:$0xff] %v564
        %569 = vst [vmem:[#allocation2 + $0x10] sm:$0xff] %v565
        %570 = vst [vmem:[#allocation2 + $0x18] sm:$0xff] %v566
        %v571 = vld [vmem:[%s207 + $0x4] sm:$0xf]
        %v572 = vld [vmem:[%s207 + $0x8] sm:$0xf]
        %v573 = vld [vmem:[%s207 + $0xc] sm:$0xf]
        %v574 = vld [vmem:[%s207 + $0x10] sm:$0xf]
        %s575 = scalar_lea.vmem [#allocation6], 192
        %v576 = vld [vmem:[%s575] sm:$0xff]
        %v577 = vld [vmem:[%s575 + $0x8] sm:$0xf]
        %v578 = vld [vmem:[%s575 + $0xc] sm:$0xff]
        %v579 = vld [vmem:[%s575 + $0x14] sm:$0xf]
        %v580 = vld [vmem:[%s575 + $0x18] sm:$0xff]
        %v581 = vld [vmem:[%s575 + $0x20] sm:$0xf]
        %v582 = vld [vmem:[%s575 + $0x24] sm:$0xff]
        %v583 = vld [vmem:[%s575 + $0x2c] sm:$0xf]
        %v584 = vld [vmem:[%s575 + $0x30] sm:$0xff]
        %v585 = vld [vmem:[%s575 + $0x38] sm:$0xf]
        %v586 = vld [vmem:[%s575 + $0x3c] sm:$0xff]
        %v587 = vld [vmem:[%s575 + $0x44] sm:$0xf]
        %v588 = vld [vmem:[%s575 + $0x48] sm:$0xff]
        %v589 = vld [vmem:[%s575 + $0x50] sm:$0xf]
        %v590 = vld [vmem:[%s575 + $0x54] sm:$0xff]
        %v591 = vld [vmem:[%s575 + $0x5c] sm:$0xf]
        %v592 = vld [vmem:[%s575 + $0x60] sm:$0xff]
        %v593 = vld [vmem:[%s575 + $0x68] sm:$0xf]
        %v594 = vld [vmem:[%s575 + $0x6c] sm:$0xff]
        %v595 = vld [vmem:[%s575 + $0x74] sm:$0xf]
        %v596 = vld [vmem:[%s575 + $0x78] sm:$0xff]
        %v597 = vld [vmem:[%s575 + $0x80] sm:$0xf]
        %v598 = vld [vmem:[%s575 + $0x84] sm:$0xff]
        %v599 = vld [vmem:[%s575 + $0x8c] sm:$0xf]
        %v600 = vld [vmem:[%s575 + $0x90] sm:$0xff]
        %v601 = vld [vmem:[%s575 + $0x98] sm:$0xf]
        %v602 = vld [vmem:[%s575 + $0x9c] sm:$0xff]
        %v603 = vld [vmem:[%s575 + $0xa4] sm:$0xf]
        %v604 = vld [vmem:[%s575 + $0xa8] sm:$0xff]
        %v605 = vld [vmem:[%s575 + $0xb0] sm:$0xf]
        %v606 = vld [vmem:[%s575 + $0xb4] sm:$0xff]
        %v607 = vld [vmem:[%s575 + $0xbc] sm:$0xf]
        %v612 = vunpack.c.l.b16 %v571
        %v613 = vunpack.c.l.b16 %v572
        %v614 = vunpack.c.l.b16 %v573
        %v615 = vunpack.c.l.b16 %v574
        %v616 = vpack.c.b16 %v613, %v612
        %v617 = vpack.c.b16 %v615, %v614
        %v652 = vunpack.c.l.b16 %v576
        %v653 = vunpack.c.h.b16 %v576
        %v654 = vunpack.c.l.b16 %v577
        %v655 = vunpack.c.l.b16 %v578
        %v656 = vunpack.c.h.b16 %v578
        %v657 = vunpack.c.l.b16 %v579
        %v658 = vunpack.c.l.b16 %v580
        %v659 = vunpack.c.h.b16 %v580
        %v660 = vunpack.c.l.b16 %v581
        %v661 = vunpack.c.l.b16 %v582
        %v662 = vunpack.c.h.b16 %v582
        %v663 = vunpack.c.l.b16 %v583
        %v664 = vunpack.c.l.b16 %v584
        %v665 = vunpack.c.h.b16 %v584
        %v666 = vunpack.c.l.b16 %v585
        %v667 = vunpack.c.l.b16 %v586
        %v668 = vunpack.c.h.b16 %v586
        %v669 = vunpack.c.l.b16 %v587
        %v670 = vunpack.c.l.b16 %v588
        %v671 = vunpack.c.h.b16 %v588
        %v672 = vunpack.c.l.b16 %v589
        %v673 = vunpack.c.l.b16 %v590
        %v674 = vunpack.c.h.b16 %v590
        %v675 = vunpack.c.l.b16 %v591
        %v676 = vunpack.c.l.b16 %v592
        %v677 = vunpack.c.h.b16 %v592
        %v678 = vunpack.c.l.b16 %v593
        %v679 = vunpack.c.l.b16 %v594
        %v680 = vunpack.c.h.b16 %v594
        %v681 = vunpack.c.l.b16 %v595
        %v682 = vunpack.c.l.b16 %v596
        %v683 = vunpack.c.h.b16 %v596
        %v684 = vunpack.c.l.b16 %v597
        %v685 = vunpack.c.l.b16 %v598
        %v686 = vunpack.c.h.b16 %v598
        %v687 = vunpack.c.l.b16 %v599
        %v688 = vunpack.c.l.b16 %v600
        %v689 = vunpack.c.h.b16 %v600
        %v690 = vunpack.c.l.b16 %v601
        %v691 = vunpack.c.l.b16 %v602
        %v692 = vunpack.c.h.b16 %v602
        %v693 = vunpack.c.l.b16 %v603
        %v694 = vunpack.c.l.b16 %v604
        %v695 = vunpack.c.h.b16 %v604
        %v696 = vunpack.c.l.b16 %v605
        %v697 = vunpack.c.l.b16 %v606
        %v698 = vunpack.c.h.b16 %v606
        %v699 = vunpack.c.l.b16 %v607
        %v700 = vpack.c.b16 %v655, %v652
        %v701 = vpack.c.b16 %v656, %v653
        %v702 = vpack.c.b16 %v657, %v654
        %v703 = vpack.c.b16 %v661, %v658
        %v704 = vpack.c.b16 %v662, %v659
        %v705 = vpack.c.b16 %v663, %v660
        %v706 = vpack.c.b16 %v667, %v664
        %v707 = vpack.c.b16 %v668, %v665
        %v708 = vpack.c.b16 %v669, %v666
        %v709 = vpack.c.b16 %v673, %v670
        %v710 = vpack.c.b16 %v674, %v671
        %v711 = vpack.c.b16 %v675, %v672
        %v712 = vpack.c.b16 %v679, %v676
        %v713 = vpack.c.b16 %v680, %v677
        %v714 = vpack.c.b16 %v681, %v678
        %v715 = vpack.c.b16 %v685, %v682
        %v716 = vpack.c.b16 %v686, %v683
        %v717 = vpack.c.b16 %v687, %v684
        %v718 = vpack.c.b16 %v691, %v688
        %v719 = vpack.c.b16 %v692, %v689
        %v720 = vpack.c.b16 %v693, %v690
        %v721 = vpack.c.b16 %v697, %v694
        %v722 = vpack.c.b16 %v698, %v695
        %v723 = vpack.c.b16 %v699, %v696
        %748 = vmatprep.subr.bf16.mxu0 %v701
        %749 = vmatpush1.bf16.msra.mxu0 %v700
        %750 = vmatprep.subr.bf16.mxu0 %v704
        %751 = vmatpush1.bf16.msra.mxu0 %v703
        %752 = vmatprep.subr.bf16.mxu0 %v707
        %753 = vmatpush1.bf16.msra.mxu0 %v706
        %754 = vmatprep.subr.bf16.mxu0 %v710
        %755 = vmatpush1.bf16.msra.mxu0 %v709
        %756 = vmatprep.subr.bf16.mxu0 %v713
        %757 = vmatpush1.bf16.msra.mxu0 %v712
        %758 = vmatprep.subr.bf16.mxu0 %v716
        %759 = vmatpush1.bf16.msra.mxu0 %v715
        %760 = vmatprep.subr.bf16.mxu0 %v719
        %761 = vmatpush1.bf16.msra.mxu0 %v718
        %762 = vmatprep.subr.bf16.mxu0 %v722
        %763 = vmatpush1.bf16.msra.mxu0 %v721
        %764 = vmatprep.subr.bf16.mxu0 0
        %765 = vmatpush1.bf16.msra.mxu0 0
        %766 = vmatprep.subr.bf16.mxu0 0
        %767 = vmatpush1.bf16.msra.mxu0 0
        %768 = vmatprep.subr.bf16.mxu0 0
        %769 = vmatpush1.bf16.msra.mxu0 0
        %770 = vmatprep.subr.bf16.mxu0 0
        %771 = vmatpush1.bf16.msra.mxu0 0
        %772 = vmatprep.subr.bf16.mxu0 0
        %773 = vmatpush1.bf16.msra.mxu0 0
        %774 = vmatprep.subr.bf16.mxu0 0
        %775 = vmatpush1.bf16.msra.mxu0 0
        %776 = vmatprep.subr.bf16.mxu0 0
        %777 = vmatpush1.bf16.msra.mxu0 0
        %778 = vmatprep.subr.bf16.mxu0 0
        %779 = vmatpush1.bf16.msra.mxu0 0
        %780 = vmatprep.mubr.bf16.mxu0 0
        %781 = vmatmul.mubr.bf16.gmra.mrb[0].mxu0 %v616
        %v782 = vpop.f32.mrb[0].mxu0
        %v783 = vadd.f32 0.0, %v782
        %v784 = vpop.f32.mrb[0].mxu0
        %v785 = vadd.f32 0.0, %v784
        %v786 = vpop.f32.mrb[0].mxu0
        %v787 = vadd.f32 0.0, %v786
        %v788 = vpop.f32.mrb[0].mxu0
        %v789 = vadd.f32 0.0, %v788
        %790 = vmatprep.mubr.bf16.mxu0 0
        %791 = vmatmul.mubr.bf16.gmra.mrb[0].mxu0 %v617
        %v792 = vpop.f32.mrb[0].mxu0
        %v793 = vadd.f32 0.0, %v792
        %v794 = vpop.f32.mrb[0].mxu0
        %v795 = vadd.f32 0.0, %v794
        %v796 = vpop.f32.mrb[0].mxu0
        %v797 = vadd.f32 0.0, %v796
        %v798 = vpop.f32.mrb[0].mxu0
        %v799 = vadd.f32 0.0, %v798
        %800 = vdwg.mxu0
        %801 = vmatprep.subr.bf16.mxu0 0
        %802 = vmatpush1.bf16.msra.mxu0 %v702
        %803 = vmatprep.subr.bf16.mxu0 0
        %804 = vmatpush1.bf16.msra.mxu0 %v705
        %805 = vmatprep.subr.bf16.mxu0 0
        %806 = vmatpush1.bf16.msra.mxu0 %v708
        %807 = vmatprep.subr.bf16.mxu0 0
        %808 = vmatpush1.bf16.msra.mxu0 %v711
        %809 = vmatprep.subr.bf16.mxu0 0
        %810 = vmatpush1.bf16.msra.mxu0 %v714
        %811 = vmatprep.subr.bf16.mxu0 0
        %812 = vmatpush1.bf16.msra.mxu0 %v717
        %813 = vmatprep.subr.bf16.mxu0 0
        %814 = vmatpush1.bf16.msra.mxu0 %v720
        %815 = vmatprep.subr.bf16.mxu0 0
        %816 = vmatpush1.bf16.msra.mxu0 %v723
        %817 = vmatprep.subr.bf16.mxu0 0
        %818 = vmatpush1.bf16.msra.mxu0 0
        %819 = vmatprep.subr.bf16.mxu0 0
        %820 = vmatpush1.bf16.msra.mxu0 0
        %821 = vmatprep.subr.bf16.mxu0 0
        %822 = vmatpush1.bf16.msra.mxu0 0
        %823 = vmatprep.subr.bf16.mxu0 0
        %824 = vmatpush1.bf16.msra.mxu0 0
        %825 = vmatprep.subr.bf16.mxu0 0
        %826 = vmatpush1.bf16.msra.mxu0 0
        %827 = vmatprep.subr.bf16.mxu0 0
        %828 = vmatpush1.bf16.msra.mxu0 0
        %829 = vmatprep.subr.bf16.mxu0 0
        %830 = vmatpush1.bf16.msra.mxu0 0
        %831 = vmatprep.subr.bf16.mxu0 0
        %832 = vmatpush1.bf16.msra.mxu0 0
        %833 = vmatprep.mubr.bf16.mxu0 0
        %834 = vmatmul.mubr.bf16.gmra.mrb[0].mxu0 %v616
        %v835 = vpop.f32.mrb[0].mxu0
        %v836 = vadd.f32 0.0, %v835
        %v837 = vpop.f32.mrb[0].mxu0
        %v838 = vpop.f32.mrb[0].mxu0
        %v839 = vadd.f32 0.0, %v838
        %v840 = vpop.f32.mrb[0].mxu0
        %841 = vmatprep.mubr.bf16.mxu0 0
        %842 = vmatmul.mubr.bf16.gmra.mrb[0].mxu0 %v617
        %v843 = vpop.f32.mrb[0].mxu0
        %v844 = vadd.f32 0.0, %v843
        %v845 = vpop.f32.mrb[0].mxu0
        %v846 = vpop.f32.mrb[0].mxu0
        %v847 = vadd.f32 0.0, %v846
        %v848 = vpop.f32.mrb[0].mxu0
        %849 = vdwg.mxu0
        %v850 = vld [vmem:[#allocation2] sm:$0xff]
        %v851 = vld [vmem:[#allocation2 + $0x8] sm:$0xff]
        %v852 = vld [vmem:[#allocation2 + $0x10] sm:$0xff]
        %v853 = vld [vmem:[#allocation2 + $0x18] sm:$0xff]
        %v854 = vrot.slane %v783, 7
        %v855 = vrot.slane %v787, 7
        %v856 = vrot.slane %v793, 7
        %v857 = vrot.slane %v797, 7
        %v858 = vsel %vm541, %v856, %v857
        %v859 = vsel %vm541, %v855, %v856
        %v860 = vsel %vm541, %v854, %v855
        %v861 = vsel %vm541, %v857, %v854
        %v862 = vadd.f32 %v861, %v785
        %v863 = vadd.f32 %v860, %v789
        %v864 = vadd.f32 %v859, %v795
        %v865 = vadd.f32 %v858, %v799
        %v866 = vrot.slane %v836, 1
        %v867 = vrot.slane %v839, 1
        %v868 = vrot.slane %v844, 1
        %v869 = vrot.slane %v847, 1
        %v870 = vsel %vm554, %v868, %v869
        %v871 = vsel %vm554, %v867, %v868
        %v872 = vsel %vm554, %v866, %v867
        %v873 = vsel %vm554, %v869, %v866
        %v874 = vadd.f32 %v862, %v872
        %v875 = vadd.f32 %v863, %v871
        %v876 = vadd.f32 %v864, %v870
        %v877 = vadd.f32 %v865, %v873
        %v878 = vadd.f32 %v850, %v874
        %v879 = vadd.f32 %v851, %v875
        %v880 = vadd.f32 %v852, %v876
        %v881 = vadd.f32 %v853, %v877
        %882 = vst [vmem:[#allocation2] sm:$0xff] %v878
        %883 = vst [vmem:[#allocation2 + $0x8] sm:$0xff] %v879
        %884 = vst [vmem:[#allocation2 + $0x10] sm:$0xff] %v880
        %885 = vst [vmem:[#allocation2 + $0x18] sm:$0xff] %v881
        %v886 = vld [vmem:[%s207 + $0x8] sm:$0xf]
        %v887 = vld [vmem:[%s207 + $0xc] sm:$0xf]
        %v888 = vld [vmem:[%s207 + $0x10] sm:$0xf]
        %v889 = vld [vmem:[%s207 + $0x14] sm:$0xf]
        %s890 = scalar_lea.vmem [#allocation6], 384
        %v891 = vld [vmem:[%s890] sm:$0xff]
        %v892 = vld [vmem:[%s890 + $0x8] sm:$0xf]
        %v893 = vld [vmem:[%s890 + $0xc] sm:$0xff]
        %v894 = vld [vmem:[%s890 + $0x14] sm:$0xf]
        %v895 = vld [vmem:[%s890 + $0x18] sm:$0xff]
        %v896 = vld [vmem:[%s890 + $0x20] sm:$0xf]
        %v897 = vld [vmem:[%s890 + $0x24] sm:$0xff]
        %v898 = vld [vmem:[%s890 + $0x2c] sm:$0xf]
        %v899 = vld [vmem:[%s890 + $0x30] sm:$0xff]
        %v900 = vld [vmem:[%s890 + $0x38] sm:$0xf]
        %v901 = vld [vmem:[%s890 + $0x3c] sm:$0xff]
        %v902 = vld [vmem:[%s890 + $0x44] sm:$0xf]
        %v903 = vld [vmem:[%s890 + $0x48] sm:$0xff]
        %v904 = vld [vmem:[%s890 + $0x50] sm:$0xf]
        %v905 = vld [vmem:[%s890 + $0x54] sm:$0xff]
        %v906 = vld [vmem:[%s890 + $0x5c] sm:$0xf]
        %v907 = vld [vmem:[%s890 + $0x60] sm:$0xff]
        %v908 = vld [vmem:[%s890 + $0x68] sm:$0xf]
        %v909 = vld [vmem:[%s890 + $0x6c] sm:$0xff]
        %v910 = vld [vmem:[%s890 + $0x74] sm:$0xf]
        %v911 = vld [vmem:[%s890 + $0x78] sm:$0xff]
        %v912 = vld [vmem:[%s890 + $0x80] sm:$0xf]
        %v913 = vld [vmem:[%s890 + $0x84] sm:$0xff]
        %v914 = vld [vmem:[%s890 + $0x8c] sm:$0xf]
        %v915 = vld [vmem:[%s890 + $0x90] sm:$0xff]
        %v916 = vld [vmem:[%s890 + $0x98] sm:$0xf]
        %v917 = vld [vmem:[%s890 + $0x9c] sm:$0xff]
        %v918 = vld [vmem:[%s890 + $0xa4] sm:$0xf]
        %v919 = vld [vmem:[%s890 + $0xa8] sm:$0xff]
        %v920 = vld [vmem:[%s890 + $0xb0] sm:$0xf]
        %v921 = vld [vmem:[%s890 + $0xb4] sm:$0xff]
        %v922 = vld [vmem:[%s890 + $0xbc] sm:$0xf]
        %v927 = vunpack.c.l.b16 %v886
        %v928 = vunpack.c.l.b16 %v887
        %v929 = vunpack.c.l.b16 %v888
        %v930 = vunpack.c.l.b16 %v889
        %v931 = vpack.c.b16 %v928, %v927
        %v932 = vpack.c.b16 %v930, %v929
        %v967 = vunpack.c.l.b16 %v891
        %v968 = vunpack.c.h.b16 %v891
        %v969 = vunpack.c.l.b16 %v892
        %v970 = vunpack.c.l.b16 %v893
        %v971 = vunpack.c.h.b16 %v893
        %v972 = vunpack.c.l.b16 %v894
        %v973 = vunpack.c.l.b16 %v895
        %v974 = vunpack.c.h.b16 %v895
        %v975 = vunpack.c.l.b16 %v896
        %v976 = vunpack.c.l.b16 %v897
        %v977 = vunpack.c.h.b16 %v897
        %v978 = vunpack.c.l.b16 %v898
        %v979 = vunpack.c.l.b16 %v899
        %v980 = vunpack.c.h.b16 %v899
        %v981 = vunpack.c.l.b16 %v900
        %v982 = vunpack.c.l.b16 %v901
        %v983 = vunpack.c.h.b16 %v901
        %v984 = vunpack.c.l.b16 %v902
        %v985 = vunpack.c.l.b16 %v903
        %v986 = vunpack.c.h.b16 %v903
        %v987 = vunpack.c.l.b16 %v904
        %v988 = vunpack.c.l.b16 %v905
        %v989 = vunpack.c.h.b16 %v905
        %v990 = vunpack.c.l.b16 %v906
        %v991 = vunpack.c.l.b16 %v907
        %v992 = vunpack.c.h.b16 %v907
        %v993 = vunpack.c.l.b16 %v908
        %v994 = vunpack.c.l.b16 %v909
        %v995 = vunpack.c.h.b16 %v909
        %v996 = vunpack.c.l.b16 %v910
        %v997 = vunpack.c.l.b16 %v911
        %v998 = vunpack.c.h.b16 %v911
        %v999 = vunpack.c.l.b16 %v912
        %v1000 = vunpack.c.l.b16 %v913
        %v1001 = vunpack.c.h.b16 %v913
        %v1002 = vunpack.c.l.b16 %v914
        %v1003 = vunpack.c.l.b16 %v915
        %v1004 = vunpack.c.h.b16 %v915
        %v1005 = vunpack.c.l.b16 %v916
        %v1006 = vunpack.c.l.b16 %v917
        %v1007 = vunpack.c.h.b16 %v917
        %v1008 = vunpack.c.l.b16 %v918
        %v1009 = vunpack.c.l.b16 %v919
        %v1010 = vunpack.c.h.b16 %v919
        %v1011 = vunpack.c.l.b16 %v920
        %v1012 = vunpack.c.l.b16 %v921
        %v1013 = vunpack.c.h.b16 %v921
        %v1014 = vunpack.c.l.b16 %v922
        %v1015 = vpack.c.b16 %v970, %v967
        %v1016 = vpack.c.b16 %v971, %v968
        %v1017 = vpack.c.b16 %v972, %v969
        %v1018 = vpack.c.b16 %v976, %v973
        %v1019 = vpack.c.b16 %v977, %v974
        %v1020 = vpack.c.b16 %v978, %v975
        %v1021 = vpack.c.b16 %v982, %v979
        %v1022 = vpack.c.b16 %v983, %v980
        %v1023 = vpack.c.b16 %v984, %v981
        %v1024 = vpack.c.b16 %v988, %v985
        %v1025 = vpack.c.b16 %v989, %v986
        %v1026 = vpack.c.b16 %v990, %v987
        %v1027 = vpack.c.b16 %v994, %v991
        %v1028 = vpack.c.b16 %v995, %v992
        %v1029 = vpack.c.b16 %v996, %v993
        %v1030 = vpack.c.b16 %v1000, %v997
        %v1031 = vpack.c.b16 %v1001, %v998
        %v1032 = vpack.c.b16 %v1002, %v999
        %v1033 = vpack.c.b16 %v1006, %v1003
        %v1034 = vpack.c.b16 %v1007, %v1004
        %v1035 = vpack.c.b16 %v1008, %v1005
        %v1036 = vpack.c.b16 %v1012, %v1009
        %v1037 = vpack.c.b16 %v1013, %v1010
        %v1038 = vpack.c.b16 %v1014, %v1011
        %1063 = vmatprep.subr.bf16.mxu0 %v1016
        %1064 = vmatpush1.bf16.msra.mxu0 %v1015
        %1065 = vmatprep.subr.bf16.mxu0 %v1019
        %1066 = vmatpush1.bf16.msra.mxu0 %v1018
        %1067 = vmatprep.subr.bf16.mxu0 %v1022
        %1068 = vmatpush1.bf16.msra.mxu0 %v1021
        %1069 = vmatprep.subr.bf16.mxu0 %v1025
        %1070 = vmatpush1.bf16.msra.mxu0 %v1024
        %1071 = vmatprep.subr.bf16.mxu0 %v1028
        %1072 = vmatpush1.bf16.msra.mxu0 %v1027
        %1073 = vmatprep.subr.bf16.mxu0 %v1031
        %1074 = vmatpush1.bf16.msra.mxu0 %v1030
        %1075 = vmatprep.subr.bf16.mxu0 %v1034
        %1076 = vmatpush1.bf16.msra.mxu0 %v1033
        %1077 = vmatprep.subr.bf16.mxu0 %v1037
        %1078 = vmatpush1.bf16.msra.mxu0 %v1036
        %1079 = vmatprep.subr.bf16.mxu0 0
        %1080 = vmatpush1.bf16.msra.mxu0 0
        %1081 = vmatprep.subr.bf16.mxu0 0
        %1082 = vmatpush1.bf16.msra.mxu0 0
        %1083 = vmatprep.subr.bf16.mxu0 0
        %1084 = vmatpush1.bf16.msra.mxu0 0
        %1085 = vmatprep.subr.bf16.mxu0 0
        %1086 = vmatpush1.bf16.msra.mxu0 0
        %1087 = vmatprep.subr.bf16.mxu0 0
        %1088 = vmatpush1.bf16.msra.mxu0 0
        %1089 = vmatprep.subr.bf16.mxu0 0
        %1090 = vmatpush1.bf16.msra.mxu0 0
        %1091 = vmatprep.subr.bf16.mxu0 0
        %1092 = vmatpush1.bf16.msra.mxu0 0
        %1093 = vmatprep.subr.bf16.mxu0 0
        %1094 = vmatpush1.bf16.msra.mxu0 0
        %1095 = vmatprep.mubr.bf16.mxu0 0
        %1096 = vmatmul.mubr.bf16.gmra.mrb[0].mxu0 %v931
        %v1097 = vpop.f32.mrb[0].mxu0
        %v1098 = vadd.f32 0.0, %v1097
        %v1099 = vpop.f32.mrb[0].mxu0
        %v1100 = vadd.f32 0.0, %v1099
        %v1101 = vpop.f32.mrb[0].mxu0
        %v1102 = vadd.f32 0.0, %v1101
        %v1103 = vpop.f32.mrb[0].mxu0
        %v1104 = vadd.f32 0.0, %v1103
        %1105 = vmatprep.mubr.bf16.mxu0 0
        %1106 = vmatmul.mubr.bf16.gmra.mrb[0].mxu0 %v932
        %v1107 = vpop.f32.mrb[0].mxu0
        %v1108 = vadd.f32 0.0, %v1107
        %v1109 = vpop.f32.mrb[0].mxu0
        %v1110 = vadd.f32 0.0, %v1109
        %v1111 = vpop.f32.mrb[0].mxu0
        %v1112 = vadd.f32 0.0, %v1111
        %v1113 = vpop.f32.mrb[0].mxu0
        %v1114 = vadd.f32 0.0, %v1113
        %1115 = vdwg.mxu0
        %1116 = vmatprep.subr.bf16.mxu0 0
        %1117 = vmatpush1.bf16.msra.mxu0 %v1017
        %1118 = vmatprep.subr.bf16.mxu0 0
        %1119 = vmatpush1.bf16.msra.mxu0 %v1020
        %1120 = vmatprep.subr.bf16.mxu0 0
        %1121 = vmatpush1.bf16.msra.mxu0 %v1023
        %1122 = vmatprep.subr.bf16.mxu0 0
        %1123 = vmatpush1.bf16.msra.mxu0 %v1026
        %1124 = vmatprep.subr.bf16.mxu0 0
        %1125 = vmatpush1.bf16.msra.mxu0 %v1029
        %1126 = vmatprep.subr.bf16.mxu0 0
        %1127 = vmatpush1.bf16.msra.mxu0 %v1032
        %1128 = vmatprep.subr.bf16.mxu0 0
        %1129 = vmatpush1.bf16.msra.mxu0 %v1035
        %1130 = vmatprep.subr.bf16.mxu0 0
        %1131 = vmatpush1.bf16.msra.mxu0 %v1038
        %1132 = vmatprep.subr.bf16.mxu0 0
        %1133 = vmatpush1.bf16.msra.mxu0 0
        %1134 = vmatprep.subr.bf16.mxu0 0
        %1135 = vmatpush1.bf16.msra.mxu0 0
        %1136 = vmatprep.subr.bf16.mxu0 0
        %1137 = vmatpush1.bf16.msra.mxu0 0
        %1138 = vmatprep.subr.bf16.mxu0 0
        %1139 = vmatpush1.bf16.msra.mxu0 0
        %1140 = vmatprep.subr.bf16.mxu0 0
        %1141 = vmatpush1.bf16.msra.mxu0 0
        %1142 = vmatprep.subr.bf16.mxu0 0
        %1143 = vmatpush1.bf16.msra.mxu0 0
        %1144 = vmatprep.subr.bf16.mxu0 0
        %1145 = vmatpush1.bf16.msra.mxu0 0
        %1146 = vmatprep.subr.bf16.mxu0 0
        %1147 = vmatpush1.bf16.msra.mxu0 0
        %1148 = vmatprep.mubr.bf16.mxu0 0
        %1149 = vmatmul.mubr.bf16.gmra.mrb[0].mxu0 %v931
        %v1150 = vpop.f32.mrb[0].mxu0
        %v1151 = vadd.f32 0.0, %v1150
        %v1152 = vpop.f32.mrb[0].mxu0
        %v1153 = vpop.f32.mrb[0].mxu0
        %v1154 = vadd.f32 0.0, %v1153
        %v1155 = vpop.f32.mrb[0].mxu0
        %1156 = vmatprep.mubr.bf16.mxu0 0
        %1157 = vmatmul.mubr.bf16.gmra.mrb[0].mxu0 %v932
        %v1158 = vpop.f32.mrb[0].mxu0
        %v1159 = vadd.f32 0.0, %v1158
        %v1160 = vpop.f32.mrb[0].mxu0
        %v1161 = vpop.f32.mrb[0].mxu0
        %v1162 = vadd.f32 0.0, %v1161
        %v1163 = vpop.f32.mrb[0].mxu0
        %1164 = vdwg.mxu0
        %v1165 = vld [vmem:[#allocation2] sm:$0xff]
        %v1166 = vld [vmem:[#allocation2 + $0x8] sm:$0xff]
        %v1167 = vld [vmem:[#allocation2 + $0x10] sm:$0xff]
        %v1168 = vld [vmem:[#allocation2 + $0x18] sm:$0xff]
        %v1169 = vrot.slane %v1098, 7
        %v1170 = vrot.slane %v1102, 7
        %v1171 = vrot.slane %v1108, 7
        %v1172 = vrot.slane %v1112, 7
        %v1173 = vsel %vm541, %v1171, %v1172
        %v1174 = vsel %vm541, %v1170, %v1171
        %v1175 = vsel %vm541, %v1169, %v1170
        %v1176 = vsel %vm541, %v1172, %v1169
        %v1177 = vadd.f32 %v1176, %v1100
        %v1178 = vadd.f32 %v1175, %v1104
        %v1179 = vadd.f32 %v1174, %v1110
        %v1180 = vadd.f32 %v1173, %v1114
        %v1181 = vrot.slane %v1151, 1
        %v1182 = vrot.slane %v1154, 1
        %v1183 = vrot.slane %v1159, 1
        %v1184 = vrot.slane %v1162, 1
        %v1185 = vsel %vm554, %v1183, %v1184
        %v1186 = vsel %vm554, %v1182, %v1183
        %v1187 = vsel %vm554, %v1181, %v1182
        %v1188 = vsel %vm554, %v1184, %v1181
        %v1189 = vadd.f32 %v1177, %v1187
        %v1190 = vadd.f32 %v1178, %v1186
        %v1191 = vadd.f32 %v1179, %v1185
        %v1192 = vadd.f32 %v1180, %v1188
        %v1193 = vadd.f32 %v1165, %v1189
        %v1194 = vadd.f32 %v1166, %v1190
        %v1195 = vadd.f32 %v1167, %v1191
        %v1196 = vadd.f32 %v1168, %v1192
        %1197 = vst [vmem:[#allocation2] sm:$0xff] %v1193
        %1198 = vst [vmem:[#allocation2 + $0x8] sm:$0xff] %v1194
        %1199 = vst [vmem:[#allocation2 + $0x10] sm:$0xff] %v1195
        %1200 = vst [vmem:[#allocation2 + $0x18] sm:$0xff] %v1196
        %v1201 = vld [vmem:[#allocation2] sm:$0xff]
        %v1202 = vld [vmem:[#allocation2 + $0x8] sm:$0xff]
        %v1203 = vld [vmem:[#allocation2 + $0x10] sm:$0xff]
        %v1204 = vld [vmem:[#allocation2 + $0x18] sm:$0xff]
        %1205 = vst [vmem:[%s236] sm:$0xff] %v1201
        %1206 = vst [vmem:[%s236 + $0x8] sm:$0xff] %v1202
        %1207 = vst [vmem:[%s236 + $0x10] sm:$0xff] %v1203
        %1208 = vst [vmem:[%s236 + $0x18] sm:$0xff] %v1204
        %s1209 = sand.u32 %s121, 1
        %s1210 = scalar_lea.sflag [#allocation5], %s1209
        %s1211 = sand.u32 %s121, 1
        %s1212 = smul.addr %s1211, 32
        %s1213 = scalar_lea.vmem [#allocation8], %s1212
        // Predicated region
        $region41: #{tpu_custom_call.1} parent=31 // pred_check
          %p1214 = pneg %p131
        $region42: #{tpu_custom_call.1} parent=31 // pred_check_branch
          %1216 = sbr.rel (%p1214) target = $region44
        $region43: #{tpu_custom_call.1} parent=31 // pred_region
          %s1218 = ssub.s32 512, 512
          %1219 = vsyncadd %s1210, %s1218
          %s1220 = smul.addr %s26, 4
          %s1221 = sadd.s32 %s25, %s1220
          %s1222 = smul.addr %s1221, 128
          %s1223 = scalar_lea.hbm %s3, %s1222
          %s1224 = sshll.u32 %s1213, 4
          %s1225 = int_to_ptr.vmem [resolvable:$true] %s1224
          %1230 = dma.vmem_to_hbm [thread:$0]  %s1225, 512, %s1223, %s1210, 128, 128, 8
        $region44: #{tpu_custom_call.1} parent=31 // pred_fallthru
          _
      $region32: #{tpu_custom_call.1} parent=5 // pred_fallthru
        _
      %p1231 = scmp.le.s32.totalorder 2, %s16
      // Predicated region
      $region45: #{tpu_custom_call.1} parent=5 // pred_check
        %p1232 = pneg %p1231
      $region46: #{tpu_custom_call.1} parent=5 // pred_check_branch
        %1234 = sbr.rel (%p1232) target = $region48
      $region47: #{tpu_custom_call.1} parent=5 // pred_region
        %s1235 = ssub.s32 %s16, 2
        // Predicated region
        $region49: #{tpu_custom_call.1} parent=47 // pred_check
          %p1236 = pneg %p137
        $region50: #{tpu_custom_call.1} parent=47 // pred_check_branch
          %1238 = sbr.rel (%p1236) target = $region52
        $region51: #{tpu_custom_call.1} parent=47 // pred_region
          %s1239 = sand.u32 %s122, 1
          %s1240 = scalar_lea.sflag [#allocation5], %s1239
          %s1241 = sand.u32 %s122, 1
          %s1242 = smul.addr %s1241, 32
          %s1243 = scalar_lea.vmem [#allocation8], %s1242
          %1244 = dma.done %s1240, 512
        $region52: #{tpu_custom_call.1} parent=47 // pred_fallthru
          _
      $region48: #{tpu_custom_call.1} parent=5 // pred_fallthru
        _
    $region6: #{tpu_custom_call.1} parent=1 // loop_footer
      %s20 = sadd.s32 1, %s16
    $region7: #{tpu_custom_call.1} parent=1 // loop_footer_branch
      %15 = sbr.rel target = $region3
    $region8: #{tpu_custom_call.1} parent=1 // loop_exit
      _
    %1245 = vsyncpa [#allocation4], 1
    %s1246 = scalar_lea.sflag [#allocation4], 1
    %1247 = vsyncpa %s1246, 1
    %1248 = vsyncpa [#allocation7], 1
    %1249 = vsyncpa [#allocation5], 1
    %s1250 = scalar_lea.sflag [#allocation5], 1
    %1251 = vsyncpa %s1250, 1

</llo_original>
